<compile_context>
chip_gen: v7x
topology: tpu7x:2x2x1
jax: 0.10.0
libtpu: 0.0.40
codegen_flags: <defaults>
</compile_context>

<pallas_src>
import jax
import jax.numpy as jnp
from jax.experimental import pallas as pl
from jax.experimental.pallas import tpu as pltpu

HL = 10          # hidden layer size (hl in the PyTorch script)
IN = 4           # input features
OUT = 3          # output classes

IN_PAD = 8       # padded input feature dim (sublane-friendly, lane dim == full array dim)
HID_PAD = 128    # padded hidden dim (lane-dense)
OUT_PAD = 128    # padded output dim (lane-dense stores)

# Packed parameter buffer layout (rows, all 128 lanes wide, f32):
#   [0   : 8  )  W1 padded  (IN_PAD,  HID_PAD)
#   [8   : 136)  W2 padded  (HID_PAD, OUT_PAD)
#   [136 : 144)  b1 in row 136 (rest zero)
#   [144 : 152)  b2 in row 144 (rest zero)
W2_ROW = IN_PAD
B1_ROW = W2_ROW + HID_PAD
B2_ROW = B1_ROW + 8
P_ROWS = B2_ROW + 8  # 152


def _mlp_kernel(x_ref, p_ref, o_ref):
    # x_ref: (TB, IN_PAD)  p_ref: (P_ROWS, 128)  o_ref: (TB, OUT_PAD)
    x = x_ref[...]
    w1 = p_ref[0:IN_PAD, :]                 # (8, 128)
    w2 = p_ref[W2_ROW:W2_ROW + HID_PAD, :]  # (128, 128)
    b1 = p_ref[B1_ROW:B1_ROW + 1, :]        # (1, 128)
    b2 = p_ref[B2_ROW:B2_ROW + 1, :]        # (1, 128)

    h = jnp.dot(x, w1, preferred_element_type=jnp.float32) + b1
    h = jnp.maximum(h, 0.0)                 # ReLU (padded cols stay 0)
    y = jnp.dot(h, w2, preferred_element_type=jnp.float32) + b2
    o_ref[...] = y.astype(o_ref.dtype)      # lane-dense (TB, 128) store


def pack_params(w1, b1, w2, b2):
    """Pad + pack PyTorch-shaped params once at init.

    w1: (IN, HL)  b1: (HL,)  w2: (HL, OUT)  b2: (OUT,)   (weights already transposed
    relative to PyTorch's (out, in) storage so the kernel computes x @ W + b).
    """
    p = jnp.zeros((P_ROWS, HID_PAD), jnp.float32)
    p = p.at[:IN, :HL].set(w1)
    p = p.at[W2_ROW:W2_ROW + HL, :OUT].set(w2)
    p = p.at[B1_ROW, :HL].set(b1)
    p = p.at[B2_ROW, :OUT].set(b2)
    return p


def net_forward(x, packed_params):
    """Pallas forward pass. x: (B, 4) f32 -> (B, 3) f32."""
    B = x.shape[0]
    # Batch tile: stream large batches in 512-row tiles (≈256 KiB/out tile f32, safe for
    # v7x's smaller VMEM even double-buffered); small batches use one padded tile.
    TB = 512 if B >= 512 else max(8, ((B + 7) // 8) * 8)
    n_tiles = pl.cdiv(B, TB)
    B_pad = n_tiles * TB

    x_pad = jnp.zeros((B_pad, IN_PAD), jnp.float32).at[:B, :IN].set(x)

    out = pl.pallas_call(
        _mlp_kernel,
        out_shape=jax.ShapeDtypeStruct((B_pad, OUT_PAD), jnp.float32),
        grid=(n_tiles,),
        in_specs=[
            pl.BlockSpec((TB, IN_PAD), lambda i: (i, 0)),        # x: tiled over batch
            pl.BlockSpec((P_ROWS, HID_PAD), lambda i: (0, 0)),   # params: resident
        ],
        out_specs=pl.BlockSpec((TB, OUT_PAD), lambda i: (i, 0)),
        compiler_params=pltpu.CompilerParams(
            dimension_semantics=("parallel",),
        ),
    )(x_pad, packed_params)

    return out[:B, :OUT]


def init_params(key):
    """PyTorch nn.Linear default init: U(-1/sqrt(fan_in), 1/sqrt(fan_in))."""
    k1, k2, k3, k4 = jax.random.split(key, 4)
    bound1 = 1.0 / jnp.sqrt(float(IN))
    bound2 = 1.0 / jnp.sqrt(float(HL))
    w1 = jax.random.uniform(k1, (IN, HL), jnp.float32, -bound1, bound1)
    b1 = jax.random.uniform(k2, (HL,), jnp.float32, -bound1, bound1)
    w2 = jax.random.uniform(k3, (HL, OUT), jnp.float32, -bound2, bound2)
    b2 = jax.random.uniform(k4, (OUT,), jnp.float32, -bound2, bound2)
    return w1, b1, w2, b2


if __name__ == "__main__":
    key = jax.random.PRNGKey(0)
    kx, kp = jax.random.split(key)

    B = 8  # small iris-style batch, 4 features each
    x = jax.random.normal(kx, (B, IN), dtype=jnp.float32)
    w1, b1, w2, b2 = init_params(kp)

    packed = pack_params(w1, b1, w2, b2)  # done once, outside the hot path

    fwd = jax.jit(net_forward)            # whole batch under one jit call
    out = jax.block_until_ready(fwd(x, packed))

    # Pure-JAX reference of the same forward pass.
    ref = jnp.maximum(x @ w1 + b1, 0.0) @ w2 + b2
    assert out.shape == (B, OUT)
    assert jnp.allclose(out, ref, atol=1e-5, rtol=1e-5)

    print("KERNEL_OK")
</pallas_src>

<mosaic_0001>
module attributes {stable_mosaic.version = 11 : i64} {
  func.func @_mlp_kernel(%arg0: i32, %arg1: memref<8x8xf32, #tpu.memory_space<vmem>>, %arg2: memref<152x128xf32, #tpu.memory_space<vmem>>, %arg3: memref<8x128xf32, #tpu.memory_space<vmem>>) attributes {dimension_semantics = [#tpu.dimension_semantics<parallel>], iteration_bounds = array<i64: 1>, scalar_prefetch = 0 : i64, scratch_operands = 0 : i64, tpu.core_type = #tpu.core_type<tc>, window_params = [{transform_indices = @transform_0, window_bounds = array<i64: 8, 8>}, {pipeline_mode = #tpu.pipeline_mode<synchronous>, transform_indices = @transform_1, window_bounds = array<i64: 152, 128>}, {transform_indices = @transform_2, window_bounds = array<i64: 8, 128>}]} {
    %c0 = arith.constant 0 : index
    %c0_0 = arith.constant 0 : index
    %0 = vector.load %arg1[%c0, %c0_0] : memref<8x8xf32, #tpu.memory_space<vmem>>, vector<8x8xf32>
    %c0_1 = arith.constant 0 : index
    %c0_2 = arith.constant 0 : index
    %1 = vector.load %arg2[%c0_1, %c0_2] : memref<152x128xf32, #tpu.memory_space<vmem>>, vector<8x128xf32>
    %c8 = arith.constant 8 : index
    %c0_3 = arith.constant 0 : index
    %2 = vector.load %arg2[%c8, %c0_3] : memref<152x128xf32, #tpu.memory_space<vmem>>, vector<128x128xf32>
    %c136 = arith.constant 136 : index
    %c0_4 = arith.constant 0 : index
    %3 = vector.load %arg2[%c136, %c0_4] : memref<152x128xf32, #tpu.memory_space<vmem>>, vector<1x128xf32>
    %c144 = arith.constant 144 : index
    %c0_5 = arith.constant 0 : index
    %4 = vector.load %arg2[%c144, %c0_5] : memref<152x128xf32, #tpu.memory_space<vmem>>, vector<1x128xf32>
    %cst = arith.constant dense<0.000000e+00> : vector<8x128xf32>
    %5 = tpu.matmul %0, %1, %cst {dimension_numbers = #tpu.dot_dimension_numbers<[1], [0], [0], [1], [0, 0, 1, 1], [], []>} : vector<8x8xf32>, vector<8x128xf32>, vector<8x128xf32> -> vector<8x128xf32>
    %6 = vector.broadcast %3 : vector<1x128xf32> to vector<8x128xf32>
    %7 = arith.addf %5, %6 : vector<8x128xf32>
    %cst_6 = arith.constant 0.000000e+00 : f32
    %8 = vector.broadcast %cst_6 : f32 to vector<8x128xf32>
    %9 = arith.maximumf %7, %8 : vector<8x128xf32>
    %cst_7 = arith.constant dense<0.000000e+00> : vector<8x128xf32>
    %10 = tpu.matmul %9, %2, %cst_7 {dimension_numbers = #tpu.dot_dimension_numbers<[1], [0], [0], [1], [0, 0, 1, 1], [], []>} : vector<8x128xf32>, vector<128x128xf32>, vector<8x128xf32> -> vector<8x128xf32>
    %11 = vector.broadcast %4 : vector<1x128xf32> to vector<8x128xf32>
    %12 = arith.addf %10, %11 : vector<8x128xf32>
    %c0_8 = arith.constant 0 : index
    %c0_9 = arith.constant 0 : index
    %13 = vector.load %arg3[%c0_8, %c0_9] : memref<8x128xf32, #tpu.memory_space<vmem>>, vector<8x128xf32>
    tpu.vector_store %arg3[%c0_8, %c0_9], %12 {strides = array<i32>} : memref<8x128xf32, #tpu.memory_space<vmem>>, vector<8x128xf32>,
    return
  }
  func.func @transform_0(%arg0: i32) -> (i32, i32) {
    %c0_i32 = arith.constant 0 : i32
    %c0_i32_0 = arith.constant 0 : i32
    return %arg0, %c0_i32 : i32, i32
  }
  func.func @transform_1(%arg0: i32) -> (i32, i32) {
    %c0_i32 = arith.constant 0 : i32
    %c0_i32_0 = arith.constant 0 : i32
    %c0_i32_1 = arith.constant 0 : i32
    return %c0_i32, %c0_i32_0 : i32, i32
  }
  func.func @transform_2(%arg0: i32) -> (i32, i32) {
    %c0_i32 = arith.constant 0 : i32
    %c0_i32_0 = arith.constant 0 : i32
    return %arg0, %c0_i32 : i32, i32
  }
}

</mosaic_0001>

<llo_original>
// kernel: net_forward.1
$region0: #{net_forward.1}
  #allocation0 [shape = 'u32[]', space=smem, size = 0x4, offset = 0x4, fixed_abs, tag = 'smem constant byte address 0x4 - core index']
  #allocation1 [shape = 'u32[144,128]{1,0:T(1,128)}', space=vmem, size = 0x12000, scoped, tag = 'internal scratch']
  %s0 = inlined_call_operand.vmem [shape: f32[8,8], index: 0, kind: input, shape index: {}]
  %s1 = inlined_call_operand.hbm [shape: f32[152,128], index: 1, kind: input, shape index: {}]
  %s2 = inlined_call_operand.vmem [shape: f32[8,128], index: 2, kind: output, shape index: {}]
  %s3 = sld [smem:[#allocation0]]
  $region22: #{net_forward.1} parent=0
    _
  %s5 = ssub.s32 1, %s3
  %s6 = scalar_select 0, %s5, %s3
  $region1: #{net_forward.1} parent=0
    #allocation2 [shape = 'u8[77824]{0}', space=vmem, size = 0x13000, scoped, tag = 'input window, operand 1, single buffered']
    #allocation3 [shape = 's32[1]{0}', space=sflag, size = 0x4, scoped, tag = 'scoped memory for net_forward.1']
    %7 = vsyncpa [#allocation3], 0
    // Predicated region
    $region2: #{net_forward.1} parent=1 // pred_check
      _
    $region3: #{net_forward.1} parent=1 // pred_check_branch
      %9 = sbr.rel (0) target = $region5
    $region4: #{net_forward.1} parent=1 // pred_region
      _
    $region5: #{net_forward.1} parent=1 // pred_fallthru
      _
    // Predicated region
    $region6: #{net_forward.1} parent=1 // pred_check
      _
    $region7: #{net_forward.1} parent=1 // pred_check_branch
      %11 = sbr.rel (0) target = $region9
    $region8: #{net_forward.1} parent=1 // pred_region
      %s13 = ssub.s32 2432, 2432
      %14 = vsyncadd [#allocation3], %s13
      %s15 = sshll.u32 [#allocation2], 4
      %s16 = int_to_ptr.vmem [resolvable:$true] %s15
      %21 = dma.hbm_to_vmem [thread:$0]  %s1, 2432, %s16, [#allocation3], 128, 128, 8
    $region9: #{net_forward.1} parent=1 // pred_fallthru
      _
    // Predicated region
    $region10: #{net_forward.1} parent=1 // pred_check
      _
    $region11: #{net_forward.1} parent=1 // pred_check_branch
      %23 = sbr.rel (0) target = $region13
    $region12: #{net_forward.1} parent=1 // pred_region
      %24 = dma.done [#allocation3], 2432
    $region13: #{net_forward.1} parent=1 // pred_fallthru
      _
    %v25 = vld [vmem:[%s0] sm:$0xff]
    %v26 = vld [vmem:[#allocation2] sm:$0xff]
    %v27 = vld [vmem:[#allocation2 + $0x8] sm:$0xff]
    %v28 = vld [vmem:[#allocation2 + $0x10] sm:$0xff]
    %v29 = vld [vmem:[#allocation2 + $0x18] sm:$0xff]
    %v30 = vld [vmem:[#allocation2 + $0x20] sm:$0xff]
    %v31 = vld [vmem:[#allocation2 + $0x28] sm:$0xff]
    %v32 = vld [vmem:[#allocation2 + $0x30] sm:$0xff]
    %v33 = vld [vmem:[#allocation2 + $0x38] sm:$0xff]
    %v34 = vld [vmem:[#allocation2 + $0x40] sm:$0xff]
    %v35 = vld [vmem:[#allocation2 + $0x48] sm:$0xff]
    %v36 = vld [vmem:[#allocation2 + $0x50] sm:$0xff]
    %v37 = vld [vmem:[#allocation2 + $0x58] sm:$0xff]
    %v38 = vld [vmem:[#allocation2 + $0x60] sm:$0xff]
    %v39 = vld [vmem:[#allocation2 + $0x68] sm:$0xff]
    %v40 = vld [vmem:[#allocation2 + $0x70] sm:$0xff]
    %v41 = vld [vmem:[#allocation2 + $0x78] sm:$0xff]
    %v42 = vld [vmem:[#allocation2 + $0x80] sm:$0xff]
    %v43 = vld [vmem:[#allocation2 + $0x88] sm:$0x1]
    %v44 = vld [vmem:[#allocation2 + $0x90] sm:$0x1]
    %v45 = vlaneseq
    %v46 = vshrl.u32 %v45, 7
    %v47 = vsub.s32 0, %v46
    %v48 = vrot.slane %v43, %v47
    %vm49 = vcmask 64512
    %v51 = vsel %vm49, %v25, 0
    %53 = vmatprep.subr.mxu0 0.0
    %54 = vmatpush1.msra.mxu0 %v26
    %55 = vmatprep.subr.mxu0 0.0
    %56 = vmatpush1.msra.mxu0 0.0
    %57 = vmatprep.subr.mxu0 0.0
    %58 = vmatpush1.msra.mxu0 0.0
    %59 = vmatprep.subr.mxu0 0.0
    %60 = vmatpush1.msra.mxu0 0.0
    %61 = vmatprep.subr.mxu0 0.0
    %62 = vmatpush1.msra.mxu0 0.0
    %63 = vmatprep.subr.mxu0 0.0
    %64 = vmatpush1.msra.mxu0 0.0
    %65 = vmatprep.subr.mxu0 0.0
    %66 = vmatpush1.msra.mxu0 0.0
    %67 = vmatprep.subr.mxu0 0.0
    %68 = vmatpush1.msra.mxu0 0.0
    %69 = vmatprep.subr.mxu0 0.0
    %70 = vmatpush1.msra.mxu0 0.0
    %71 = vmatprep.subr.mxu0 0.0
    %72 = vmatpush1.msra.mxu0 0.0
    %73 = vmatprep.subr.mxu0 0.0
    %74 = vmatpush1.msra.mxu0 0.0
    %75 = vmatprep.subr.mxu0 0.0
    %76 = vmatpush1.msra.mxu0 0.0
    %77 = vmatprep.subr.mxu0 0.0
    %78 = vmatpush1.msra.mxu0 0.0
    %79 = vmatprep.subr.mxu0 0.0
    %80 = vmatpush1.msra.mxu0 0.0
    %81 = vmatprep.subr.mxu0 0.0
    %82 = vmatpush1.msra.mxu0 0.0
    %83 = vmatprep.subr.mxu0 0.0
    %84 = vmatpush1.msra.mxu0 0.0
    %85 = vmatprep.subr.mxu0 0.0
    %86 = vmatpush1.msra.mxu0 0.0
    %87 = vmatprep.subr.mxu0 0.0
    %88 = vmatpush1.msra.mxu0 0.0
    %89 = vmatprep.subr.mxu0 0.0
    %90 = vmatpush1.msra.mxu0 0.0
    %91 = vmatprep.subr.mxu0 0.0
    %92 = vmatpush1.msra.mxu0 0.0
    %93 = vmatprep.subr.mxu0 0.0
    %94 = vmatpush1.msra.mxu0 0.0
    %95 = vmatprep.subr.mxu0 0.0
    %96 = vmatpush1.msra.mxu0 0.0
    %97 = vmatprep.subr.mxu0 0.0
    %98 = vmatpush1.msra.mxu0 0.0
    %99 = vmatprep.subr.mxu0 0.0
    %100 = vmatpush1.msra.mxu0 0.0
    %101 = vmatprep.subr.mxu0 0.0
    %102 = vmatpush1.msra.mxu0 0.0
    %103 = vmatprep.subr.mxu0 0.0
    %104 = vmatpush1.msra.mxu0 0.0
    %105 = vmatprep.subr.mxu0 0.0
    %106 = vmatpush1.msra.mxu0 0.0
    %107 = vmatprep.subr.mxu0 0.0
    %108 = vmatpush1.msra.mxu0 0.0
    %109 = vmatprep.subr.mxu0 0.0
    %110 = vmatpush1.msra.mxu0 0.0
    %111 = vmatprep.subr.mxu0 0.0
    %112 = vmatpush1.msra.mxu0 0.0
    %113 = vmatprep.subr.mxu0 0.0
    %114 = vmatpush1.msra.mxu0 0.0
    %115 = vmatprep.subr.mxu0 0.0
    %116 = vmatpush1.msra.mxu0 0.0
    %117 = vmatprep.mubr.f32.mxu0 0.0
    %118 = vmatmul.mubr.f32.gmra.mrb[0].mxu0 %v51
    %v119 = vpop.f32.mrb[0].mxu0
    %v120 = vadd.f32 %v48, %v119
    %v121 = vpop.f32.mrb[0].mxu0
    %122 = vdwg.mxu0
    %v123 = vmax.f32 %v120, 0.0
    %v124 = vlaneseq
    %v125 = vshrl.u32 %v124, 7
    %v126 = vsub.s32 0, %v125
    %v127 = vrot.slane %v44, %v126
    %128 = vmatprep.subr.mxu0 0.0
    %129 = vmatpush1.msra.mxu0 %v27
    %130 = vmatprep.subr.mxu0 0.0
    %131 = vmatpush1.msra.mxu0 %v28
    %132 = vmatprep.subr.mxu0 0.0
    %133 = vmatpush1.msra.mxu0 %v29
    %134 = vmatprep.subr.mxu0 0.0
    %135 = vmatpush1.msra.mxu0 %v30
    %136 = vmatprep.subr.mxu0 0.0
    %137 = vmatpush1.msra.mxu0 %v31
    %138 = vmatprep.subr.mxu0 0.0
    %139 = vmatpush1.msra.mxu0 %v32
    %140 = vmatprep.subr.mxu0 0.0
    %141 = vmatpush1.msra.mxu0 %v33
    %142 = vmatprep.subr.mxu0 0.0
    %143 = vmatpush1.msra.mxu0 %v34
    %144 = vmatprep.subr.mxu0 0.0
    %145 = vmatpush1.msra.mxu0 %v35
    %146 = vmatprep.subr.mxu0 0.0
    %147 = vmatpush1.msra.mxu0 %v36
    %148 = vmatprep.subr.mxu0 0.0
    %149 = vmatpush1.msra.mxu0 %v37
    %150 = vmatprep.subr.mxu0 0.0
    %151 = vmatpush1.msra.mxu0 %v38
    %152 = vmatprep.subr.mxu0 0.0
    %153 = vmatpush1.msra.mxu0 %v39
    %154 = vmatprep.subr.mxu0 0.0
    %155 = vmatpush1.msra.mxu0 %v40
    %156 = vmatprep.subr.mxu0 0.0
    %157 = vmatpush1.msra.mxu0 %v41
    %158 = vmatprep.subr.mxu0 0.0
    %159 = vmatpush1.msra.mxu0 %v42
    %160 = vmatprep.subr.mxu0 0.0
    %161 = vmatpush1.msra.mxu0 0.0
    %162 = vmatprep.subr.mxu0 0.0
    %163 = vmatpush1.msra.mxu0 0.0
    %164 = vmatprep.subr.mxu0 0.0
    %165 = vmatpush1.msra.mxu0 0.0
    %166 = vmatprep.subr.mxu0 0.0
    %167 = vmatpush1.msra.mxu0 0.0
    %168 = vmatprep.subr.mxu0 0.0
    %169 = vmatpush1.msra.mxu0 0.0
    %170 = vmatprep.subr.mxu0 0.0
    %171 = vmatpush1.msra.mxu0 0.0
    %172 = vmatprep.subr.mxu0 0.0
    %173 = vmatpush1.msra.mxu0 0.0
    %174 = vmatprep.subr.mxu0 0.0
    %175 = vmatpush1.msra.mxu0 0.0
    %176 = vmatprep.subr.mxu0 0.0
    %177 = vmatpush1.msra.mxu0 0.0
    %178 = vmatprep.subr.mxu0 0.0
    %179 = vmatpush1.msra.mxu0 0.0
    %180 = vmatprep.subr.mxu0 0.0
    %181 = vmatpush1.msra.mxu0 0.0
    %182 = vmatprep.subr.mxu0 0.0
    %183 = vmatpush1.msra.mxu0 0.0
    %184 = vmatprep.subr.mxu0 0.0
    %185 = vmatpush1.msra.mxu0 0.0
    %186 = vmatprep.subr.mxu0 0.0
    %187 = vmatpush1.msra.mxu0 0.0
    %188 = vmatprep.subr.mxu0 0.0
    %189 = vmatpush1.msra.mxu0 0.0
    %190 = vmatprep.subr.mxu0 0.0
    %191 = vmatpush1.msra.mxu0 0.0
    %192 = vmatprep.mubr.f32.mxu0 0.0
    %193 = vmatmul.mubr.f32.gmra.mrb[0].mxu0 %v123
    %v194 = vpop.f32.mrb[0].mxu0
    %v195 = vadd.f32 %v127, %v194
    %v196 = vpop.f32.mrb[0].mxu0
    %197 = vdwg.mxu0
    %198 = vst [vmem:[%s2] sm:$0xff] %v195
    // Predicated region
    $region14: #{net_forward.1} parent=1 // pred_check
      _
    $region15: #{net_forward.1} parent=1 // pred_check_branch
      %200 = sbr.rel (0) target = $region17
    $region16: #{net_forward.1} parent=1 // pred_region
      _
    $region17: #{net_forward.1} parent=1 // pred_fallthru
      _
    // Predicated region
    $region18: #{net_forward.1} parent=1 // pred_check
      _
    $region19: #{net_forward.1} parent=1 // pred_check_branch
      %202 = sbr.rel (0) target = $region21
    $region20: #{net_forward.1} parent=1 // pred_region
      _
    $region21: #{net_forward.1} parent=1 // pred_fallthru
      _
    %203 = vsyncpa [#allocation3], 1

</llo_original>
